<compile_context>
chip_gen: v5e
topology: v5e:2x2
jax: 0.10.0
libtpu: 0.0.40
codegen_flags: <defaults>
</compile_context>

<pallas_src>
import math
import functools

import jax
import jax.numpy as jnp
from jax.experimental import pallas as pl
from jax.experimental.pallas import tpu as pltpu

MiB = 1024 * 1024


# --------------------------- VMEM / tiling policy ---------------------------
def _vmem_policy():
    """Generation-aware VMEM budgets (v7x: 64 MiB/TC, v5e/v6e: 128 MiB)."""
    try:
        cap = int(pltpu.get_tpu_info().vmem_capacity_bytes)
    except Exception:
        cap = 64 * MiB                          # conservative fallback
    if cap <= 64 * MiB:                         # v7x-class TensorCore
        return dict(data_block_cap=4 * MiB, footprint_budget=40 * MiB,
                    vmem_limit=48 * MiB)
    # v5e / v6e: 128 MiB physical VMEM -> bigger blocks amortize the ~0.35us
    # per-step pipeline overhead (HBM-bound kernel).
    return dict(data_block_cap=8 * MiB, footprint_budget=56 * MiB,
                vmem_limit=64 * MiB)


def _pick_batch_tile(B, block_img_bytes, img_f32_bytes, const_bytes, policy):
    """Largest batch tile whose *total* per-step VMEM footprint fits the budget.

    Footprint per grid step:
      input block x2 (double-buffered) + output block x2 (double-buffered)
      + ~3 full-size fp32 temporaries (x*x, broadcast gate, gated product)
      + constant matrices x2 (the pipeline double-buffers those too).
    """
    def footprint(tb):
        return 4 * tb * block_img_bytes + 3 * tb * img_f32_bytes + 2 * const_bytes

    def fits(tb):
        return (tb * block_img_bytes <= policy["data_block_cap"]
                and footprint(tb) <= policy["footprint_budget"])

    divisors = [d for d in range(1, B + 1) if B % d == 0]
    # Prefer an even grid length >= 4 (2-TC megacore -> >= 2 double-buffered
    # steps per core), then grid >= 2, then anything that fits.
    for pred in (lambda tb: B // tb >= 4 and (B // tb) % 2 == 0,
                 lambda tb: B // tb >= 2,
                 lambda tb: True):
        cands = [d for d in divisors if pred(d) and fits(d)]
        if cands:
            return max(cands)
    # TODO(synk): single image already exceeds the per-step budget (huge C*HW);
    # a channel-split grid accumulating the cross-channel t/u stats in VMEM
    # scratch would be needed for that regime (relevant mainly on v7x).
    return 1


# ------------------------------ MCA kernel ----------------------------------
def mca_kernel(x_ref, pool_ref, expand_ref, w_ref, a_ref, o_ref,
               *, C, H, W, KMAX):
    f32 = jnp.float32
    HW = H * W
    pad_max = (KMAX - 1) // 2
    x = x_ref[...]                                # (TB, C, HW), lane-dense
    xf = x.astype(f32)
    tb = xf.shape[0]

    # ---- shared one-pass statistics (sum and sum-of-squares) ---------------
    x2 = xf * xf
    s_c = jnp.sum(xf, axis=2)                     # (TB, C)  pooled over H*W
    q_c = jnp.sum(x2, axis=2)
    t = jnp.sum(xf, axis=1)                       # (TB, HW) pooled over C
    u = jnp.sum(x2, axis=1)

    # fused per-row / per-col pooling: (TB, HW) @ (HW, H+W)
    sp = jnp.dot(t, pool_ref[...], preferred_element_type=f32)   # (TB, H+W)
    qp = jnp.dot(u, pool_ref[...], preferred_element_type=f32)
    s_h, s_w = sp[:, :H], sp[:, H:]
    q_h, q_w = qp[:, :H], qp[:, H:]

    def band_conv(v, row):
        # z[a] = sum_j w[j] * v[a - pad + j] (zero-padded); taps centred in KMAX
        L = v.shape[1]
        if pad_max > 0:
            z = jnp.zeros((tb, pad_max), f32)
            vp = jnp.concatenate([z, v, z], axis=1)
        else:
            vp = v
        out = jnp.zeros_like(v)
        for m in range(KMAX):                     # tiny static unroll (VPU work)
            out = out + w_ref[row, m] * vp[:, m:m + L]
        return out

    def gate(s, q, n, row):
        mean = s * (1.0 / n)
        var = jnp.maximum(q - s * mean, 0.0) * (1.0 / (n - 1))   # unbiased, clamped
        std = jnp.sqrt(var)
        v = a_ref[row, 0] * mean + a_ref[row, 1] * std
        z = band_conv(v, row)
        # fold the final 1/3 averaging into the tiny gate (saves a full-tile mul)
        return (1.0 / 3.0) / (1.0 + jnp.exp(-z))

    g_c = gate(s_c, q_c, HW, 0)                   # (TB, C)
    g_h = gate(s_h, q_h, C * W, 1)                # (TB, H)
    g_w = gate(s_w, q_w, C * H, 2)                # (TB, W)

    # expand the tiny H / W gates back to the flat H*W lane axis in one dot
    g_hw = jnp.dot(jnp.concatenate([g_h, g_w], axis=1), expand_ref[...],
                   preferred_element_type=f32)    # (TB, HW)

    if o_ref.dtype == jnp.float32:
        o_ref[...] = xf * (g_c[:, :, None] + g_hw[:, None, :])
    else:
        # cast the tiny gates down instead of x up (no full-tile fp32 copy)
        gcn = g_c.astype(o_ref.dtype)
        ghn = g_hw.astype(o_ref.dtype)
        o_ref[...] = x * (gcn[:, :, None] + ghn[:, None, :])


# ------------------------------ MCA wrapper ----------------------------------
def mca_layer(x, params):
    """x: (B, C, H, W). params: (conv_h, mix_h, conv_w, mix_w, conv_c, mix_c)."""
    B, C, H, W = x.shape
    HW = H * W
    assert HW > 1 and C * W > 1 and C * H > 1, "ddof=1 statistics need >1 element"
    conv_h, mix_h, conv_w, mix_w, conv_c, mix_c = params
    f32 = jnp.float32

    k_c, k_h, k_w = int(conv_c.shape[0]), int(conv_h.shape[0]), int(conv_w.shape[0])
    assert k_c % 2 == 1 and k_h % 2 == 1 and k_w % 2 == 1
    kmax = max(k_c, k_h, k_w)

    def _embed(w):                                # centre a k-tap filter in kmax taps
        k = int(w.shape[0])
        off = (kmax - k) // 2
        return jnp.zeros((kmax,), f32).at[off:off + k].set(w.astype(f32))

    # single SMEM tap table + single SMEM mix table (rows: channel, height, width)
    w_all = jnp.stack([_embed(conv_c), _embed(conv_h), _embed(conv_w)])    # (3, kmax)
    a_all = jnp.stack([0.5 + jax.nn.sigmoid(mix_c),
                       0.5 + jax.nn.sigmoid(mix_h),
                       0.5 + jax.nn.sigmoid(mix_w)]).astype(f32)           # (3, 2)

    # batch-invariant pooling / expansion matrices, built once on the host
    p = jnp.arange(HW)
    p_h = (p[:, None] // W == jnp.arange(H)[None, :]).astype(f32)          # (HW, H)
    p_w = (p[:, None] % W == jnp.arange(W)[None, :]).astype(f32)           # (HW, W)
    pool = jnp.concatenate([p_h, p_w], axis=1)                             # (HW, H+W)
    expand = pool.T                                                        # (H+W, HW)

    x_flat = x.reshape(B, C, HW)                  # lane-dense last dimension

    policy = _vmem_policy()
    itemsize = x.dtype.itemsize
    const_bytes = int(pool.size + expand.size) * 4
    tb = _pick_batch_tile(B, C * HW * itemsize, C * HW * 4, const_bytes, policy)
    grid = (B // tb,)

    kernel = functools.partial(mca_kernel, C=C, H=H, W=W, KMAX=kmax)
    smem = pl.BlockSpec(memory_space=pltpu.MemorySpace.SMEM)
    cost = pl.CostEstimate(
        flops=int(8 * B * C * HW),
        transcendentals=int(4 * B * (C + H + W)),
        bytes_accessed=int(2 * B * C * HW * itemsize + const_bytes),
    )

    out_flat = pl.pallas_call(
        kernel,
        out_shape=jax.ShapeDtypeStruct((B, C, HW), x.dtype),
        grid=grid,
        in_specs=[
            pl.BlockSpec((tb, C, HW), lambda b: (b, 0, 0)),
            pl.BlockSpec(pool.shape, lambda b: (0, 0)),
            pl.BlockSpec(expand.shape, lambda b: (0, 0)),
            smem,   # w_all (band-conv taps)
            smem,   # a_all (mix coefficients)
        ],
        out_specs=pl.BlockSpec((tb, C, HW), lambda b: (b, 0, 0)),
        compiler_params=pltpu.CompilerParams(
            dimension_semantics=("parallel",),
            vmem_limit_bytes=policy["vmem_limit"],
        ),
        cost_estimate=cost,
    )(x_flat, pool, expand, w_all, a_all)
    return out_flat.reshape(B, C, H, W)


# --------------------- SqueezeExcitation (RegNet SE gate) -------------------
def se_kernel(x_ref, w1_ref, b1_ref, w2_ref, b2_ref, o_ref, *, inv_hw):
    f32 = jnp.float32
    x = x_ref[...]                                # (TB, C, HW), lane-dense
    xf = x.astype(f32)
    mean = jnp.sum(xf, axis=2) * inv_hw           # (TB, C)  global average pool
    h = jnp.dot(mean, w1_ref[...], preferred_element_type=f32) + b1_ref[...]
    h = jnp.maximum(h, 0.0)                       # ReLU
    z = jnp.dot(h, w2_ref[...], preferred_element_type=f32) + b2_ref[...]
    g = 1.0 / (1.0 + jnp.exp(-z))                 # sigmoid gate, (TB, C)
    if o_ref.dtype == jnp.float32:
        o_ref[...] = xf * g[:, :, None]
    else:
        o_ref[...] = x * g.astype(o_ref.dtype)[:, :, None]


def squeeze_excitation(x, w1, b1, w2, b2):
    """Fused SE forward: x * sigmoid(fc2(relu(fc1(gap(x)))))."""
    B, C, H, W = x.shape
    HW = H * W
    f32 = jnp.float32
    S = int(w1.shape[1])
    x_flat = x.reshape(B, C, HW)

    policy = _vmem_policy()
    itemsize = x.dtype.itemsize
    const_bytes = int(w1.size + b1.size + w2.size + b2.size) * 4
    tb = _pick_batch_tile(B, C * HW * itemsize, C * HW * 4, const_bytes, policy)
    grid = (B // tb,)

    cost = pl.CostEstimate(
        flops=int(3 * B * C * HW + 4 * B * C * S),
        transcendentals=int(B * C),
        bytes_accessed=int(2 * B * C * HW * itemsize + const_bytes),
    )

    out_flat = pl.pallas_call(
        functools.partial(se_kernel, inv_hw=1.0 / HW),
        out_shape=jax.ShapeDtypeStruct((B, C, HW), x.dtype),
        grid=grid,
        in_specs=[
            pl.BlockSpec((tb, C, HW), lambda b: (b, 0, 0)),
            pl.BlockSpec((C, S), lambda b: (0, 0)),
            pl.BlockSpec((1, S), lambda b: (0, 0)),
            pl.BlockSpec((S, C), lambda b: (0, 0)),
            pl.BlockSpec((1, C), lambda b: (0, 0)),
        ],
        out_specs=pl.BlockSpec((tb, C, HW), lambda b: (b, 0, 0)),
        compiler_params=pltpu.CompilerParams(
            dimension_semantics=("parallel",),
            vmem_limit_bytes=policy["vmem_limit"],
        ),
        cost_estimate=cost,
    )(x_flat, w1.astype(f32), b1.reshape(1, S).astype(f32),
      w2.astype(f32), b2.reshape(1, C).astype(f32))
    return out_flat.reshape(B, C, H, W)


# ---------------------------- pure-JAX references ---------------------------
def _gate_ref(x, conv_w, mix_sig, k):
    b, c, h, w = x.shape
    avg = jnp.mean(x, axis=(2, 3), keepdims=True)
    std = jnp.std(x.reshape(b, c, -1), axis=2, ddof=1).reshape(b, c, 1, 1)
    out = 0.5 * (avg + std) + mix_sig[0] * avg + mix_sig[1] * std
    v = out[:, :, 0, 0]
    pad = (k - 1) // 2
    vp = jnp.pad(v, ((0, 0), (pad, pad)))
    conv = jnp.zeros_like(v)
    for j in range(k):
        conv = conv + conv_w[j] * vp[:, j:j + c]
    gate = jax.nn.sigmoid(conv)[:, :, None, None]
    return x * gate


def mca_layer_ref(x, params):
    conv_h, mix_h, conv_w, mix_w, conv_c, mix_c = params
    sh, sw, sc = jax.nn.sigmoid(mix_h), jax.nn.sigmoid(mix_w), jax.nn.sigmoid(mix_c)
    x_h = jnp.transpose(x, (0, 2, 1, 3))
    x_h = _gate_ref(x_h, conv_h, sh, conv_h.shape[0])
    x_h = jnp.transpose(x_h, (0, 2, 1, 3))
    x_w = jnp.transpose(x, (0, 3, 2, 1))
    x_w = _gate_ref(x_w, conv_w, sw, conv_w.shape[0])
    x_w = jnp.transpose(x_w, (0, 3, 2, 1))
    x_c = _gate_ref(x, conv_c, sc, conv_c.shape[0])
    return (x_c + x_h + x_w) / 3.0


def squeeze_excitation_ref(x, w1, b1, w2, b2):
    scale = jnp.mean(x, axis=(2, 3))
    h = jnp.maximum(scale @ w1 + b1, 0.0)
    g = jax.nn.sigmoid(h @ w2 + b2)
    return x * g[:, :, None, None]


# --------------------------------- test -------------------------------------
if __name__ == "__main__":
    key = jax.random.PRNGKey(0)

    # ---------------- MCA gating layer ----------------
    B, C, H, W = 2, 4, 16, 16

    # MCALayer channel-gate kernel-size rule (inp = C).
    lambd, gamma = 1.5, 1.0
    temp = round(abs((math.log2(C) - gamma) / lambd))
    k_c = temp if temp % 2 else temp - 1
    k_c = max(k_c, 1)

    kx, k1, k2, k3, k4, k5, k6, k7, k8, k9, k10, k11 = jax.random.split(key, 12)
    x = jax.random.normal(kx, (B, C, H, W), jnp.float32)
    conv_h = jax.random.uniform(k1, (3,), jnp.float32, -0.5, 0.5)    # h_cw conv (1,1,1,3)
    mix_h = jax.random.uniform(k2, (2,), jnp.float32)                # torch.rand(2)
    conv_w = jax.random.uniform(k3, (3,), jnp.float32, -0.5, 0.5)    # w_hc conv
    mix_w = jax.random.uniform(k4, (2,), jnp.float32)
    conv_c = jax.random.uniform(k5, (k_c,), jnp.float32, -0.5, 0.5)  # c_hw conv
    mix_c = jax.random.uniform(k6, (2,), jnp.float32)
    params = (conv_h, mix_h, conv_w, mix_w, conv_c, mix_c)

    out = jax.block_until_ready(mca_layer(x, params))
    ref = mca_layer_ref(x, params)
    assert out.shape == x.shape and out.dtype == x.dtype
    err = float(jnp.max(jnp.abs(out - ref)))
    assert jnp.allclose(out, ref, atol=5e-4, rtol=2e-3), err

    # ------------- SqueezeExcitation (RegNet Bottleneck SE) -------------
    Cs, Ss = 8, 2      # expand_c = 8, se_ratio = 0.25 -> squeeze_c = 2
    xs = jax.random.normal(k7, (B, Cs, H, W), jnp.float32)
    w1 = jax.random.normal(k8, (Cs, Ss), jnp.float32) * 0.3
    b1 = jax.random.normal(k9, (Ss,), jnp.float32) * 0.1
    w2 = jax.random.normal(k10, (Ss, Cs), jnp.float32) * 0.3
    b2 = jax.random.normal(k11, (Cs,), jnp.float32) * 0.1

    out_se = jax.block_until_ready(squeeze_excitation(xs, w1, b1, w2, b2))
    ref_se = squeeze_excitation_ref(xs, w1, b1, w2, b2)
    err_se = float(jnp.max(jnp.abs(out_se - ref_se)))
    assert jnp.allclose(out_se, ref_se, atol=1e-4, rtol=1e-3), err_se

    print("KERNEL_OK")
</pallas_src>

<mosaic_0001>
module attributes {stable_mosaic.version = 11 : i64} {
  func.func @mca_kernel(%arg0: i32, %arg1: memref<1x4x256xf32, #tpu.memory_space<vmem>>, %arg2: memref<256x32xf32, #tpu.memory_space<vmem>>, %arg3: memref<32x256xf32, #tpu.memory_space<vmem>>, %arg4: memref<3x3xf32, #tpu.memory_space<smem>>, %arg5: memref<3x2xf32, #tpu.memory_space<smem>>, %arg6: memref<1x4x256xf32, #tpu.memory_space<vmem>>) attributes {dimension_semantics = [#tpu.dimension_semantics<parallel>], iteration_bounds = array<i64: 2>, scalar_prefetch = 0 : i64, scratch_operands = 0 : i64, tpu.core_type = #tpu.core_type<tc>, window_params = [{transform_indices = @transform_0, window_bounds = array<i64: 1, 4, 256>}, {pipeline_mode = #tpu.pipeline_mode<synchronous>, transform_indices = @transform_1, window_bounds = array<i64: 256, 32>}, {pipeline_mode = #tpu.pipeline_mode<synchronous>, transform_indices = @transform_2, window_bounds = array<i64: 32, 256>}, {transform_indices = @transform_3, window_bounds = array<i64: 3, 3>}, {transform_indices = @transform_4, window_bounds = array<i64: 3, 2>}, {transform_indices = @transform_5, window_bounds = array<i64: 1, 4, 256>}]} {
    %c0 = arith.constant 0 : index
    %c0_0 = arith.constant 0 : index
    %c0_1 = arith.constant 0 : index
    %0 = vector.load %arg1[%c0, %c0_0, %c0_1] : memref<1x4x256xf32, #tpu.memory_space<vmem>>, vector<1x4x256xf32>
    %1 = arith.mulf %0, %0 : vector<1x4x256xf32>
    %cst = arith.constant dense<0.000000e+00> : vector<1x4xf32>
    %2 = vector.multi_reduction <add>, %0, %cst [2] : vector<1x4x256xf32> to vector<1x4xf32>
    %cst_2 = arith.constant dense<0.000000e+00> : vector<1x4xf32>
    %3 = vector.multi_reduction <add>, %1, %cst_2 [2] : vector<1x4x256xf32> to vector<1x4xf32>
    %cst_3 = arith.constant dense<0.000000e+00> : vector<1x256xf32>
    %4 = vector.multi_reduction <add>, %0, %cst_3 [1] : vector<1x4x256xf32> to vector<1x256xf32>
    %cst_4 = arith.constant dense<0.000000e+00> : vector<1x256xf32>
    %5 = vector.multi_reduction <add>, %1, %cst_4 [1] : vector<1x4x256xf32> to vector<1x256xf32>
    %c0_5 = arith.constant 0 : index
    %c0_6 = arith.constant 0 : index
    %6 = vector.load %arg2[%c0_5, %c0_6] : memref<256x32xf32, #tpu.memory_space<vmem>>, vector<256x32xf32>
    %cst_7 = arith.constant dense<0.000000e+00> : vector<1x32xf32>
    %7 = tpu.matmul %4, %6, %cst_7 {dimension_numbers = #tpu.dot_dimension_numbers<[1], [0], [0], [1], [0, 0, 1, 1], [], []>} : vector<1x256xf32>, vector<256x32xf32>, vector<1x32xf32> -> vector<1x32xf32>
    %c0_8 = arith.constant 0 : index
    %c0_9 = arith.constant 0 : index
    %8 = vector.load %arg2[%c0_8, %c0_9] : memref<256x32xf32, #tpu.memory_space<vmem>>, vector<256x32xf32>
    %cst_10 = arith.constant dense<0.000000e+00> : vector<1x32xf32>
    %9 = tpu.matmul %5, %8, %cst_10 {dimension_numbers = #tpu.dot_dimension_numbers<[1], [0], [0], [1], [0, 0, 1, 1], [], []>} : vector<1x256xf32>, vector<256x32xf32>, vector<1x32xf32> -> vector<1x32xf32>
    %10 = vector.extract_strided_slice %7 {offsets = [0, 0], sizes = [1, 16], strides = [1, 1]} : vector<1x32xf32> to vector<1x16xf32>
    %11 = vector.extract_strided_slice %7 {offsets = [0, 16], sizes = [1, 16], strides = [1, 1]} : vector<1x32xf32> to vector<1x16xf32>
    %12 = vector.extract_strided_slice %9 {offsets = [0, 0], sizes = [1, 16], strides = [1, 1]} : vector<1x32xf32> to vector<1x16xf32>
    %13 = vector.extract_strided_slice %9 {offsets = [0, 16], sizes = [1, 16], strides = [1, 1]} : vector<1x32xf32> to vector<1x16xf32>
    %cst_11 = arith.constant 3.906250e-03 : f32
    %14 = vector.broadcast %cst_11 : f32 to vector<1x4xf32>
    %15 = arith.mulf %2, %14 : vector<1x4xf32>
    %16 = arith.mulf %2, %15 : vector<1x4xf32>
    %17 = arith.subf %3, %16 : vector<1x4xf32>
    %cst_12 = arith.constant 0.000000e+00 : f32
    %18 = vector.broadcast %cst_12 : f32 to vector<1x4xf32>
    %19 = arith.maximumf %17, %18 : vector<1x4xf32>
    %cst_13 = arith.constant 0.00392156886 : f32
    %20 = vector.broadcast %cst_13 : f32 to vector<1x4xf32>
    %21 = arith.mulf %19, %20 : vector<1x4xf32>
    %22 = math.sqrt %21 : vector<1x4xf32>
    %c0_14 = arith.constant 0 : index
    %c0_15 = arith.constant 0 : index
    %23 = memref.load %arg5[%c0_14, %c0_15] : memref<3x2xf32, #tpu.memory_space<smem>>
    %24 = vector.broadcast %23 : f32 to vector<1x4xf32>
    %25 = arith.mulf %24, %15 : vector<1x4xf32>
    %c0_16 = arith.constant 0 : index
    %c1 = arith.constant 1 : index
    %26 = memref.load %arg5[%c0_16, %c1] : memref<3x2xf32, #tpu.memory_space<smem>>
    %27 = vector.broadcast %26 : f32 to vector<1x4xf32>
    %28 = arith.mulf %27, %22 : vector<1x4xf32>
    %29 = arith.addf %25, %28 : vector<1x4xf32>
    %cst_17 = arith.constant 0.000000e+00 : f32
    %30 = vector.broadcast %cst_17 : f32 to vector<1x1xf32>
    %31 = tpu.concatenate %30, %29, %30 in 1 : vector<1x1xf32>, vector<1x4xf32>, vector<1x1xf32> -> vector<1x6xf32>
    %cst_18 = arith.constant 0.000000e+00 : f32
    %32 = vector.broadcast %cst_18 : f32 to vector<1x4xf32>
    %c0_19 = arith.constant 0 : index
    %c0_20 = arith.constant 0 : index
    %33 = memref.load %arg4[%c0_19, %c0_20] : memref<3x3xf32, #tpu.memory_space<smem>>
    %34 = vector.extract_strided_slice %31 {offsets = [0, 0], sizes = [1, 4], strides = [1, 1]} : vector<1x6xf32> to vector<1x4xf32>
    %35 = vector.broadcast %33 : f32 to vector<1x4xf32>
    %36 = arith.mulf %35, %34 : vector<1x4xf32>
    %37 = arith.addf %32, %36 : vector<1x4xf32>
    %c0_21 = arith.constant 0 : index
    %c1_22 = arith.constant 1 : index
    %38 = memref.load %arg4[%c0_21, %c1_22] : memref<3x3xf32, #tpu.memory_space<smem>>
    %39 = vector.extract_strided_slice %31 {offsets = [0, 1], sizes = [1, 4], strides = [1, 1]} : vector<1x6xf32> to vector<1x4xf32>
    %40 = vector.broadcast %38 : f32 to vector<1x4xf32>
    %41 = arith.mulf %40, %39 : vector<1x4xf32>
    %42 = arith.addf %37, %41 : vector<1x4xf32>
    %c0_23 = arith.constant 0 : index
    %c2 = arith.constant 2 : index
    %43 = memref.load %arg4[%c0_23, %c2] : memref<3x3xf32, #tpu.memory_space<smem>>
    %44 = vector.extract_strided_slice %31 {offsets = [0, 2], sizes = [1, 4], strides = [1, 1]} : vector<1x6xf32> to vector<1x4xf32>
    %45 = vector.broadcast %43 : f32 to vector<1x4xf32>
    %46 = arith.mulf %45, %44 : vector<1x4xf32>
    %47 = arith.addf %42, %46 : vector<1x4xf32>
    %cst_24 = arith.constant 0.000000e+00 : f32
    %48 = vector.broadcast %cst_24 : f32 to vector<1x4xf32>
    %49 = arith.subf %48, %47 : vector<1x4xf32>
    %50 = math.exp %49 : vector<1x4xf32>
    %cst_25 = arith.constant 1.000000e+00 : f32
    %51 = vector.broadcast %cst_25 : f32 to vector<1x4xf32>
    %52 = arith.addf %51, %50 : vector<1x4xf32>
    %cst_26 = arith.constant 0.333333343 : f32
    %53 = vector.broadcast %cst_26 : f32 to vector<1x4xf32>
    %54 = arith.divf %53, %52 : vector<1x4xf32>
    %cst_27 = arith.constant 1.562500e-02 : f32
    %55 = vector.broadcast %cst_27 : f32 to vector<1x16xf32>
    %56 = arith.mulf %10, %55 : vector<1x16xf32>
    %57 = arith.mulf %10, %56 : vector<1x16xf32>
    %58 = arith.subf %12, %57 : vector<1x16xf32>
    %cst_28 = arith.constant 0.000000e+00 : f32
    %59 = vector.broadcast %cst_28 : f32 to vector<1x16xf32>
    %60 = arith.maximumf %58, %59 : vector<1x16xf32>
    %cst_29 = arith.constant 0.0158730168 : f32
    %61 = vector.broadcast %cst_29 : f32 to vector<1x16xf32>
    %62 = arith.mulf %60, %61 : vector<1x16xf32>
    %63 = math.sqrt %62 : vector<1x16xf32>
    %c1_30 = arith.constant 1 : index
    %c0_31 = arith.constant 0 : index
    %64 = memref.load %arg5[%c1_30, %c0_31] : memref<3x2xf32, #tpu.memory_space<smem>>
    %65 = vector.broadcast %64 : f32 to vector<1x16xf32>
    %66 = arith.mulf %65, %56 : vector<1x16xf32>
    %c1_32 = arith.constant 1 : index
    %c1_33 = arith.constant 1 : index
    %67 = memref.load %arg5[%c1_32, %c1_33] : memref<3x2xf32, #tpu.memory_space<smem>>
    %68 = vector.broadcast %67 : f32 to vector<1x16xf32>
    %69 = arith.mulf %68, %63 : vector<1x16xf32>
    %70 = arith.addf %66, %69 : vector<1x16xf32>
    %cst_34 = arith.constant 0.000000e+00 : f32
    %71 = vector.broadcast %cst_34 : f32 to vector<1x1xf32>
    %72 = tpu.concatenate %71, %70, %71 in 1 : vector<1x1xf32>, vector<1x16xf32>, vector<1x1xf32> -> vector<1x18xf32>
    %cst_35 = arith.constant 0.000000e+00 : f32
    %73 = vector.broadcast %cst_35 : f32 to vector<1x16xf32>
    %c1_36 = arith.constant 1 : index
    %c0_37 = arith.constant 0 : index
    %74 = memref.load %arg4[%c1_36, %c0_37] : memref<3x3xf32, #tpu.memory_space<smem>>
    %75 = vector.extract_strided_slice %72 {offsets = [0, 0], sizes = [1, 16], strides = [1, 1]} : vector<1x18xf32> to vector<1x16xf32>
    %76 = vector.broadcast %74 : f32 to vector<1x16xf32>
    %77 = arith.mulf %76, %75 : vector<1x16xf32>
    %78 = arith.addf %73, %77 : vector<1x16xf32>
    %c1_38 = arith.constant 1 : index
    %c1_39 = arith.constant 1 : index
    %79 = memref.load %arg4[%c1_38, %c1_39] : memref<3x3xf32, #tpu.memory_space<smem>>
    %80 = vector.extract_strided_slice %72 {offsets = [0, 1], sizes = [1, 16], strides = [1, 1]} : vector<1x18xf32> to vector<1x16xf32>
    %81 = vector.broadcast %79 : f32 to vector<1x16xf32>
    %82 = arith.mulf %81, %80 : vector<1x16xf32>
    %83 = arith.addf %78, %82 : vector<1x16xf32>
    %c1_40 = arith.constant 1 : index
    %c2_41 = arith.constant 2 : index
    %84 = memref.load %arg4[%c1_40, %c2_41] : memref<3x3xf32, #tpu.memory_space<smem>>
    %85 = vector.extract_strided_slice %72 {offsets = [0, 2], sizes = [1, 16], strides = [1, 1]} : vector<1x18xf32> to vector<1x16xf32>
    %86 = vector.broadcast %84 : f32 to vector<1x16xf32>
    %87 = arith.mulf %86, %85 : vector<1x16xf32>
    %88 = arith.addf %83, %87 : vector<1x16xf32>
    %cst_42 = arith.constant 0.000000e+00 : f32
    %89 = vector.broadcast %cst_42 : f32 to vector<1x16xf32>
    %90 = arith.subf %89, %88 : vector<1x16xf32>
    %91 = math.exp %90 : vector<1x16xf32>
    %cst_43 = arith.constant 1.000000e+00 : f32
    %92 = vector.broadcast %cst_43 : f32 to vector<1x16xf32>
    %93 = arith.addf %92, %91 : vector<1x16xf32>
    %cst_44 = arith.constant 0.333333343 : f32
    %94 = vector.broadcast %cst_44 : f32 to vector<1x16xf32>
    %95 = arith.divf %94, %93 : vector<1x16xf32>
    %cst_45 = arith.constant 1.562500e-02 : f32
    %96 = vector.broadcast %cst_45 : f32 to vector<1x16xf32>
    %97 = arith.mulf %11, %96 : vector<1x16xf32>
    %98 = arith.mulf %11, %97 : vector<1x16xf32>
    %99 = arith.subf %13, %98 : vector<1x16xf32>
    %cst_46 = arith.constant 0.000000e+00 : f32
    %100 = vector.broadcast %cst_46 : f32 to vector<1x16xf32>
    %101 = arith.maximumf %99, %100 : vector<1x16xf32>
    %cst_47 = arith.constant 0.0158730168 : f32
    %102 = vector.broadcast %cst_47 : f32 to vector<1x16xf32>
    %103 = arith.mulf %101, %102 : vector<1x16xf32>
    %104 = math.sqrt %103 : vector<1x16xf32>
    %c2_48 = arith.constant 2 : index
    %c0_49 = arith.constant 0 : index
    %105 = memref.load %arg5[%c2_48, %c0_49] : memref<3x2xf32, #tpu.memory_space<smem>>
    %106 = vector.broadcast %105 : f32 to vector<1x16xf32>
    %107 = arith.mulf %106, %97 : vector<1x16xf32>
    %c2_50 = arith.constant 2 : index
    %c1_51 = arith.constant 1 : index
    %108 = memref.load %arg5[%c2_50, %c1_51] : memref<3x2xf32, #tpu.memory_space<smem>>
    %109 = vector.broadcast %108 : f32 to vector<1x16xf32>
    %110 = arith.mulf %109, %104 : vector<1x16xf32>
    %111 = arith.addf %107, %110 : vector<1x16xf32>
    %cst_52 = arith.constant 0.000000e+00 : f32
    %112 = vector.broadcast %cst_52 : f32 to vector<1x1xf32>
    %113 = tpu.concatenate %112, %111, %112 in 1 : vector<1x1xf32>, vector<1x16xf32>, vector<1x1xf32> -> vector<1x18xf32>
    %cst_53 = arith.constant 0.000000e+00 : f32
    %114 = vector.broadcast %cst_53 : f32 to vector<1x16xf32>
    %c2_54 = arith.constant 2 : index
    %c0_55 = arith.constant 0 : index
    %115 = memref.load %arg4[%c2_54, %c0_55] : memref<3x3xf32, #tpu.memory_space<smem>>
    %116 = vector.extract_strided_slice %113 {offsets = [0, 0], sizes = [1, 16], strides = [1, 1]} : vector<1x18xf32> to vector<1x16xf32>
    %117 = vector.broadcast %115 : f32 to vector<1x16xf32>
    %118 = arith.mulf %117, %116 : vector<1x16xf32>
    %119 = arith.addf %114, %118 : vector<1x16xf32>
    %c2_56 = arith.constant 2 : index
    %c1_57 = arith.constant 1 : index
    %120 = memref.load %arg4[%c2_56, %c1_57] : memref<3x3xf32, #tpu.memory_space<smem>>
    %121 = vector.extract_strided_slice %113 {offsets = [0, 1], sizes = [1, 16], strides = [1, 1]} : vector<1x18xf32> to vector<1x16xf32>
    %122 = vector.broadcast %120 : f32 to vector<1x16xf32>
    %123 = arith.mulf %122, %121 : vector<1x16xf32>
    %124 = arith.addf %119, %123 : vector<1x16xf32>
    %c2_58 = arith.constant 2 : index
    %c2_59 = arith.constant 2 : index
    %125 = memref.load %arg4[%c2_58, %c2_59] : memref<3x3xf32, #tpu.memory_space<smem>>
    %126 = vector.extract_strided_slice %113 {offsets = [0, 2], sizes = [1, 16], strides = [1, 1]} : vector<1x18xf32> to vector<1x16xf32>
    %127 = vector.broadcast %125 : f32 to vector<1x16xf32>
    %128 = arith.mulf %127, %126 : vector<1x16xf32>
    %129 = arith.addf %124, %128 : vector<1x16xf32>
    %cst_60 = arith.constant 0.000000e+00 : f32
    %130 = vector.broadcast %cst_60 : f32 to vector<1x16xf32>
    %131 = arith.subf %130, %129 : vector<1x16xf32>
    %132 = math.exp %131 : vector<1x16xf32>
    %cst_61 = arith.constant 1.000000e+00 : f32
    %133 = vector.broadcast %cst_61 : f32 to vector<1x16xf32>
    %134 = arith.addf %133, %132 : vector<1x16xf32>
    %cst_62 = arith.constant 0.333333343 : f32
    %135 = vector.broadcast %cst_62 : f32 to vector<1x16xf32>
    %136 = arith.divf %135, %134 : vector<1x16xf32>
    %137 = tpu.concatenate %95, %136 in 1 : vector<1x16xf32>, vector<1x16xf32> -> vector<1x32xf32>
    %c0_63 = arith.constant 0 : index
    %c0_64 = arith.constant 0 : index
    %138 = vector.load %arg3[%c0_63, %c0_64] : memref<32x256xf32, #tpu.memory_space<vmem>>, vector<32x256xf32>
    %cst_65 = arith.constant dense<0.000000e+00> : vector<1x256xf32>
    %139 = tpu.matmul %137, %138, %cst_65 {dimension_numbers = #tpu.dot_dimension_numbers<[1], [0], [0], [1], [0, 0, 1, 1], [], []>} : vector<1x32xf32>, vector<32x256xf32>, vector<1x256xf32> -> vector<1x256xf32>
    %140 = vector.shape_cast %54 : vector<1x4xf32> to vector<1x4x1xf32>
    %141 = vector.shape_cast %139 : vector<1x256xf32> to vector<1x1x256xf32>
    %142 = vector.broadcast %140 : vector<1x4x1xf32> to vector<1x4x256xf32>
    %143 = vector.broadcast %141 : vector<1x1x256xf32> to vector<1x4x256xf32>
    %144 = arith.addf %142, %143 : vector<1x4x256xf32>
    %145 = arith.mulf %0, %144 : vector<1x4x256xf32>
    %c0_66 = arith.constant 0 : index
    %c0_67 = arith.constant 0 : index
    %c0_68 = arith.constant 0 : index
    %146 = vector.load %arg6[%c0_66, %c0_67, %c0_68] : memref<1x4x256xf32, #tpu.memory_space<vmem>>, vector<1x4x256xf32>
    tpu.vector_store %arg6[%c0_66, %c0_67, %c0_68], %145 {strides = array<i32>} : memref<1x4x256xf32, #tpu.memory_space<vmem>>, vector<1x4x256xf32>,
    return
  }
  func.func @transform_0(%arg0: i32) -> (i32, i32, i32) {
    %c0_i32 = arith.constant 0 : i32
    %c0_i32_0 = arith.constant 0 : i32
    %c0_i32_1 = arith.constant 0 : i32
    return %arg0, %c0_i32, %c0_i32_0 : i32, i32, i32
  }
  func.func @transform_1(%arg0: i32) -> (i32, i32) {
    %c0_i32 = arith.constant 0 : i32
    %c0_i32_0 = arith.constant 0 : i32
    %c0_i32_1 = arith.constant 0 : i32
    return %c0_i32, %c0_i32_0 : i32, i32
  }
  func.func @transform_2(%arg0: i32) -> (i32, i32) {
    %c0_i32 = arith.constant 0 : i32
    %c0_i32_0 = arith.constant 0 : i32
    %c0_i32_1 = arith.constant 0 : i32
    return %c0_i32, %c0_i32_0 : i32, i32
  }
  func.func @transform_3(%arg0: i32) -> (i32, i32) {
    %c0_i32 = arith.constant 0 : i32
    %c0_i32_0 = arith.constant 0 : i32
    %c0_i32_1 = arith.constant 0 : i32
    return %c0_i32, %c0_i32_0 : i32, i32
  }
  func.func @transform_4(%arg0: i32) -> (i32, i32) {
    %c0_i32 = arith.constant 0 : i32
    %c0_i32_0 = arith.constant 0 : i32
    %c0_i32_1 = arith.constant 0 : i32
    return %c0_i32, %c0_i32_0 : i32, i32
  }
  func.func @transform_5(%arg0: i32) -> (i32, i32, i32) {
    %c0_i32 = arith.constant 0 : i32
    %c0_i32_0 = arith.constant 0 : i32
    %c0_i32_1 = arith.constant 0 : i32
    return %arg0, %c0_i32, %c0_i32_0 : i32, i32, i32
  }
}

</mosaic_0001>

<llo_original>
// kernel: tpu_custom_call.1
$region0: #{tpu_custom_call.1}
  #allocation0 [shape = 'u32[]', space=smem, size = 0x4, offset = 0x4, fixed_abs, tag = 'smem constant byte address 0x4 - core index']
  #allocation1 [shape = 'u32[72,128]{1,0:T(1,128)}', space=vmem, size = 0x9000, scoped, tag = 'internal scratch']
  %s0 = inlined_call_operand.vmem [shape: f32[2,4,256], index: 0, kind: input, shape index: {}]
  %s1 = inlined_call_operand.vmem [shape: f32[256,32], index: 1, kind: input, shape index: {}]
  %s2 = inlined_call_operand.vmem [shape: f32[32,256], index: 2, kind: input, shape index: {}]
  %s3 = inlined_call_operand.vmem [shape: f32[3,3], index: 3, kind: input, shape index: {}]
  %s4 = inlined_call_operand.vmem [shape: f32[3,2], index: 4, kind: input, shape index: {}]
  %s5 = inlined_call_operand.hbm [shape: f32[2,4,256], index: 5, kind: output, shape index: {}]
  %s6 = sld [smem:[#allocation0]]
  $region61: #{tpu_custom_call.1} parent=0
    _
  %s8 = ssub.s32 1, %s6
  %s9 = scalar_select 0, %s8, %s6
  $region1: #{tpu_custom_call.1} parent=0
    #allocation2 [shape = 'u8[2048]{0}', space=smem, size = 0x800, scoped, tag = 'input window, operand 3, single buffered']
    #allocation3 [shape = 's32[2]{0}', space=sflag, size = 0x8, scoped, tag = 'scoped memory for tpu_custom_call.1']
    #allocation4 [shape = 's32[2]{0}', space=sflag, size = 0x8, scoped, tag = 'scoped memory for tpu_custom_call.1']
    #allocation5 [shape = 'u8[2048]{0}', space=smem, size = 0x800, scoped, tag = 'input window, operand 4, single buffered']
    #allocation6 [shape = 's32[1]{0}', space=sflag, size = 0x4, scoped, tag = 'scoped memory for tpu_custom_call.1']
    #allocation7 [shape = 'u8[8192]{0}', space=vmem, size = 0x2000, scoped, tag = 'output window, operand 0']
    %10 = vsyncpa [#allocation4], 0
    %11 = vsyncpa [#allocation6], 0
    %12 = vsyncpa [#allocation3], 0
    %s13 = scalar_lea.sflag [#allocation3], 1
    %14 = vsyncpa %s13, 0
    loop: start=0, step=1, limit=4
    $region2: #{tpu_custom_call.1} parent=1 // loop_pre_header
      _
    $region3: #{tpu_custom_call.1} parent=1 // loop_header
      %s16 = sphi 0, %s20
      %p17 = scmp.ge.s32.totalorder %s16, 4
      %s26 = sphi 0, %s28
      %s29 = sphi 0, %s26
      %s30 = sphi 0, %s29
      %s46 = sphi 0, %s30
      %s50 = sphi 0, %s50
      %s52 = sphi 0, %s50
      %s53 = sphi 0, %s52
      %s67 = sphi 0, %s53
      %s71 = sphi 0, %s71
      %s73 = sphi 0, %s71
      %s74 = sphi 0, %s73
      %s88 = sphi 0, %s74
      %s92 = sphi 0, %s92
      %s94 = sphi 0, %s92
      %s95 = sphi 0, %s94
      %s109 = sphi 0, %s95
      %s113 = sphi 0, %s113
      %s115 = sphi 0, %s113
      %s116 = sphi 0, %s115
      %s130 = sphi 0, %s116
      %s136 = sphi 0, %s138
      %s139 = sphi 0, %s136
      %s140 = sphi 0, %s139
      %s156 = sphi 0, %s140
    $region4: #{tpu_custom_call.1} parent=1 // loop_header_branch
      %19 = sbr.rel (%p17) target = $region8
    $region5: #{tpu_custom_call.1} parent=1 // loop_body
      %s21 = ssub.s32 %s16, 1
      %s22 = ssub.s32 %s16, 2
      %s23 = sadd.s32 %s16, 1
      %s24 = ssub.s32 %s16, %s23
      %p25 = scmp.eq.s32.totalorder %s24, 0
      %s27 = sadd.s32 %s26, 1
      %s28 = scalar_select %p25, %s26, %s27
      %p31 = pneg %p25
      %p32 = scmp.eq.s32.totalorder %s16, 1
      %p33 = por %p31, %p32
      %p34 = scmp.ne.s32.totalorder %s26, %s29
      %p35 = scmp.eq.s32.totalorder %s16, 0
      %p36 = por %p34, %p35
      %p37 = scmp.ne.s32.totalorder %s26, %s29
      %p38 = scmp.eq.s32.totalorder %s21, 1
      %p39 = por %p37, %p38
      %p40 = scmp.ne.s32.totalorder %s29, %s30
      %p41 = scmp.eq.s32.totalorder %s21, 0
      %p42 = por %p40, %p41
      %p43 = scmp.ne.s32.totalorder %s29, %s30
      %p44 = scmp.eq.s32.totalorder %s22, 1
      %p45 = por %p43, %p44
      %p47 = scmp.ne.s32.totalorder %s30, %s46
      %p48 = scmp.eq.s32.totalorder %s22, 0
      %p49 = por %p47, %p48
      %s51 = sadd.s32 %s50, 1
      %p54 = scmp.eq.s32.totalorder %s16, 1
      %p55 = scmp.ne.s32.totalorder %s50, %s52
      %p56 = scmp.eq.s32.totalorder %s16, 0
      %p57 = por %p55, %p56
      %p58 = scmp.ne.s32.totalorder %s50, %s52
      %p59 = scmp.eq.s32.totalorder %s21, 1
      %p60 = por %p58, %p59
      %p61 = scmp.ne.s32.totalorder %s52, %s53
      %p62 = scmp.eq.s32.totalorder %s21, 0
      %p63 = por %p61, %p62
      %p64 = scmp.ne.s32.totalorder %s52, %s53
      %p65 = scmp.eq.s32.totalorder %s22, 1
      %p66 = por %p64, %p65
      %p68 = scmp.ne.s32.totalorder %s53, %s67
      %p69 = scmp.eq.s32.totalorder %s22, 0
      %p70 = por %p68, %p69
      %s72 = sadd.s32 %s71, 1
      %p75 = scmp.eq.s32.totalorder %s16, 1
      %p76 = scmp.ne.s32.totalorder %s71, %s73
      %p77 = scmp.eq.s32.totalorder %s16, 0
      %p78 = por %p76, %p77
      %p79 = scmp.ne.s32.totalorder %s71, %s73
      %p80 = scmp.eq.s32.totalorder %s21, 1
      %p81 = por %p79, %p80
      %p82 = scmp.ne.s32.totalorder %s73, %s74
      %p83 = scmp.eq.s32.totalorder %s21, 0
      %p84 = por %p82, %p83
      %p85 = scmp.ne.s32.totalorder %s73, %s74
      %p86 = scmp.eq.s32.totalorder %s22, 1
      %p87 = por %p85, %p86
      %p89 = scmp.ne.s32.totalorder %s74, %s88
      %p90 = scmp.eq.s32.totalorder %s22, 0
      %p91 = por %p89, %p90
      %s93 = sadd.s32 %s92, 1
      %p96 = scmp.eq.s32.totalorder %s16, 1
      %p97 = scmp.ne.s32.totalorder %s92, %s94
      %p98 = scmp.eq.s32.totalorder %s16, 0
      %p99 = por %p97, %p98
      %p100 = scmp.ne.s32.totalorder %s92, %s94
      %p101 = scmp.eq.s32.totalorder %s21, 1
      %p102 = por %p100, %p101
      %p103 = scmp.ne.s32.totalorder %s94, %s95
      %p104 = scmp.eq.s32.totalorder %s21, 0
      %p105 = por %p103, %p104
      %p106 = scmp.ne.s32.totalorder %s94, %s95
      %p107 = scmp.eq.s32.totalorder %s22, 1
      %p108 = por %p106, %p107
      %p110 = scmp.ne.s32.totalorder %s95, %s109
      %p111 = scmp.eq.s32.totalorder %s22, 0
      %p112 = por %p110, %p111
      %s114 = sadd.s32 %s113, 1
      %p117 = scmp.eq.s32.totalorder %s16, 1
      %p118 = scmp.ne.s32.totalorder %s113, %s115
      %p119 = scmp.eq.s32.totalorder %s16, 0
      %p120 = por %p118, %p119
      %p121 = scmp.ne.s32.totalorder %s113, %s115
      %p122 = scmp.eq.s32.totalorder %s21, 1
      %p123 = por %p121, %p122
      %p124 = scmp.ne.s32.totalorder %s115, %s116
      %p125 = scmp.eq.s32.totalorder %s21, 0
      %p126 = por %p124, %p125
      %p127 = scmp.ne.s32.totalorder %s115, %s116
      %p128 = scmp.eq.s32.totalorder %s22, 1
      %p129 = por %p127, %p128
      %p131 = scmp.ne.s32.totalorder %s116, %s130
      %p132 = scmp.eq.s32.totalorder %s22, 0
      %p133 = por %p131, %p132
      %s134 = ssub.s32 %s16, %s23
      %p135 = scmp.eq.s32.totalorder %s134, 0
      %s137 = sadd.s32 %s136, 1
      %s138 = scalar_select %p135, %s136, %s137
      %p141 = pneg %p135
      %p142 = scmp.eq.s32.totalorder %s16, 1
      %p143 = por %p141, %p142
      %p144 = scmp.ne.s32.totalorder %s136, %s139
      %p145 = scmp.eq.s32.totalorder %s16, 0
      %p146 = por %p144, %p145
      %p147 = scmp.ne.s32.totalorder %s136, %s139
      %p148 = scmp.eq.s32.totalorder %s21, 1
      %p149 = por %p147, %p148
      %p150 = scmp.ne.s32.totalorder %s139, %s140
      %p151 = scmp.eq.s32.totalorder %s21, 0
      %p152 = por %p150, %p151
      %p153 = scmp.ne.s32.totalorder %s139, %s140
      %p154 = scmp.eq.s32.totalorder %s22, 1
      %p155 = por %p153, %p154
      %p157 = scmp.ne.s32.totalorder %s140, %s156
      %p158 = scmp.eq.s32.totalorder %s22, 0
      %p159 = por %p157, %p158
      %p160 = scmp.le.s32.totalorder 1, %s16
      %p161 = scmp.lt.s32.totalorder %s16, 3
      %p162 = pnand %p160, %p161
      %p163 = pneg %p162
      // Predicated region
      $region9: #{tpu_custom_call.1} parent=5 // pred_check
        _
      $region10: #{tpu_custom_call.1} parent=5 // pred_check_branch
        %165 = sbr.rel (%p162) target = $region12
      $region11: #{tpu_custom_call.1} parent=5 // pred_region
        %s166 = ssub.s32 %s16, 1
        // Predicated region
        $region13: #{tpu_custom_call.1} parent=11 // pred_check
          %p167 = pneg %p63
        $region14: #{tpu_custom_call.1} parent=11 // pred_check_branch
          %169 = sbr.rel (%p167) target = $region16
        $region15: #{tpu_custom_call.1} parent=11 // pred_region
          _
        $region16: #{tpu_custom_call.1} parent=11 // pred_fallthru
          _
        // Predicated region
        $region17: #{tpu_custom_call.1} parent=11 // pred_check
          %p170 = pneg %p84
        $region18: #{tpu_custom_call.1} parent=11 // pred_check_branch
          %172 = sbr.rel (%p170) target = $region20
        $region19: #{tpu_custom_call.1} parent=11 // pred_region
          _
        $region20: #{tpu_custom_call.1} parent=11 // pred_fallthru
          _
        // Predicated region
        $region21: #{tpu_custom_call.1} parent=11 // pred_check
          %p173 = pneg %p105
        $region22: #{tpu_custom_call.1} parent=11 // pred_check_branch
          %175 = sbr.rel (%p173) target = $region24
        $region23: #{tpu_custom_call.1} parent=11 // pred_region
          %177 = vsyncadd [#allocation4], 0
          %s179 = sshll.u32 %s3, 4
          %s180 = int_to_ptr.vmem [resolvable:$true] %s179
          %182 = dma.vmem_to_smem %s180, 64, [#allocation2], [#allocation4]
        $region24: #{tpu_custom_call.1} parent=11 // pred_fallthru
          _
        // Predicated region
        $region25: #{tpu_custom_call.1} parent=11 // pred_check
          %p183 = pneg %p126
        $region26: #{tpu_custom_call.1} parent=11 // pred_check_branch
          %185 = sbr.rel (%p183) target = $region28
        $region27: #{tpu_custom_call.1} parent=11 // pred_region
          %187 = vsyncadd [#allocation6], 0
          %s189 = sshll.u32 %s4, 4
          %s190 = int_to_ptr.vmem [resolvable:$true] %s189
          %192 = dma.vmem_to_smem %s190, 64, [#allocation5], [#allocation6]
        $region28: #{tpu_custom_call.1} parent=11 // pred_fallthru
          _
      $region12: #{tpu_custom_call.1} parent=5 // pred_fallthru
        _
      %p193 = scmp.lt.s32.totalorder %s16, 2
      // Predicated region
      $region29: #{tpu_custom_call.1} parent=5 // pred_check
        %p194 = pneg %p193
      $region30: #{tpu_custom_call.1} parent=5 // pred_check_branch
        %196 = sbr.rel (%p194) target = $region32
      $region31: #{tpu_custom_call.1} parent=5 // pred_region
        // Predicated region
        $region33: #{tpu_custom_call.1} parent=31 // pred_check
          %p197 = pneg %p36
        $region34: #{tpu_custom_call.1} parent=31 // pred_check_branch
          %199 = sbr.rel (%p197) target = $region36
        $region35: #{tpu_custom_call.1} parent=31 // pred_region
          %p200 = scmp.lt.s32.totalorder %s16, 1
          %s201 = scalar_select %p200, %s16, 1
          %s202 = smul.addr %s201, 2
          %s203 = smul.addr %s202, 4
          %s204 = scalar_lea.vmem %s0, %s203
        $region36: #{tpu_custom_call.1} parent=31 // pred_fallthru
          _
      $region32: #{tpu_custom_call.1} parent=5 // pred_fallthru
        _
      %p205 = scmp.le.s32.totalorder 1, %s16
      %p206 = scmp.lt.s32.totalorder %s16, 3
      %p207 = pnand %p205, %p206
      %p208 = pneg %p207
      // Predicated region
      $region37: #{tpu_custom_call.1} parent=5 // pred_check
        _
      $region38: #{tpu_custom_call.1} parent=5 // pred_check_branch
        %210 = sbr.rel (%p207) target = $region40
      $region39: #{tpu_custom_call.1} parent=5 // pred_region
        %s211 = ssub.s32 %s16, 1
        // Predicated region
        $region41: #{tpu_custom_call.1} parent=39 // pred_check
          %p212 = pneg %p105
        $region42: #{tpu_custom_call.1} parent=39 // pred_check_branch
          %214 = sbr.rel (%p212) target = $region44
        $region43: #{tpu_custom_call.1} parent=39 // pred_region
          %216 = dma.done [#allocation4], 64
        $region44: #{tpu_custom_call.1} parent=39 // pred_fallthru
          _
        // Predicated region
        $region45: #{tpu_custom_call.1} parent=39 // pred_check
          %p217 = pneg %p126
        $region46: #{tpu_custom_call.1} parent=39 // pred_check_branch
          %219 = sbr.rel (%p217) target = $region48
        $region47: #{tpu_custom_call.1} parent=39 // pred_region
          %221 = dma.done [#allocation6], 64
        $region48: #{tpu_custom_call.1} parent=39 // pred_fallthru
          _
        %222 = sfence
        %p223 = scmp.lt.s32.totalorder %s21, 1
        %s224 = scalar_select %p223, %s21, 1
        %s225 = smul.addr %s224, 2
        %s226 = smul.addr %s225, 4
        %s227 = scalar_lea.vmem %s0, %s226
        %p228 = pneg %p42
        %p229 = pneg %p39
        %p230 = pneg %p63
        %p231 = pneg %p60
        %p232 = pneg %p84
        %p233 = pneg %p81
        %p234 = pneg %p105
        %p235 = pneg %p102
        %p236 = pneg %p126
        %p237 = pneg %p123
        %p238 = pneg %p152
        %p239 = pneg %p149
        %s240 = sand.u32 %s139, 1
        %s241 = scalar_lea.sflag [#allocation3], %s240
        %s242 = sand.u32 %s139, 1
        %s243 = smul.addr %s242, 8
        %s244 = scalar_lea.vmem [#allocation7], %s243
        %p245 = scmp.lt.s32.totalorder %s21, 1
        %s246 = scalar_select %p245, %s21, 1
        %s247 = smul.addr %s246, 2
        %s248 = smul.addr %s247, 4
        %s249 = scalar_lea.vmem %s0, %s248
        %v250 = vld [vmem:[%s249] sm:$0xff]
        %v251 = vmul.f32 %v250, %v250
        %253 = vst [vmem:[#allocation1] ss:$2 sm:$0xff] %v250
        %v254 = vld.sshfl [vmem:[#allocation1] sm:$0xff pattern:$0x75316420]
        %v255 = vld.sshfl [vmem:[#allocation1 + $0x8] sm:$0xff pattern:$0x75316420]
        %vm258 = vcmask 1043456
        %v259 = vsel %vm258, %v254, 0.0
        %v260 = vsel %vm258, %v255, 0.0
        %v261 = vadd.f32 %v259, %v260
        %262 = vadd.xlane.f32.xlu0 %v261
        %v263 = vpop.xlane.xlu0 %262
        %265 = vst [vmem:[#allocation1] ss:$2 sm:$0xff] %v251
        %v266 = vld.sshfl [vmem:[#allocation1] sm:$0xff pattern:$0x75316420]
        %v267 = vld.sshfl [vmem:[#allocation1 + $0x8] sm:$0xff pattern:$0x75316420]
        %v270 = vsel %vm258, %v266, 0.0
        %v271 = vsel %vm258, %v267, 0.0
        %v272 = vadd.f32 %v270, %v271
        %273 = vadd.xlane.f32.xlu0 %v272
        %v274 = vpop.xlane.xlu0 %273
        %275 = vst [vmem:[#allocation1] ss:$2 sm:$0xff] %v250
        %v276 = vld.sshfl [vmem:[#allocation1] sm:$0xff pattern:$0x75316420]
        %v277 = vld.sshfl [vmem:[#allocation1 + $0x8] sm:$0xff pattern:$0x75316420]
        %v280 = vsel %vm258, %v276, 0.0
        %v281 = vrot.slane %v280, 4
        %v282 = vadd.f32 %v280, %v281
        %v283 = vrot.slane %v282, 2
        %v284 = vadd.f32 %v282, %v283
        %v285 = vrot.slane %v284, 1
        %v286 = vadd.f32 %v284, %v285
        %v287 = vsel %vm258, %v277, 0.0
        %v288 = vrot.slane %v287, 4
        %v289 = vadd.f32 %v287, %v288
        %v290 = vrot.slane %v289, 2
        %v291 = vadd.f32 %v289, %v290
        %v292 = vrot.slane %v291, 1
        %v293 = vadd.f32 %v291, %v292
        %294 = vst [vmem:[#allocation1] ss:$2 sm:$0xff] %v251
        %v295 = vld.sshfl [vmem:[#allocation1] sm:$0xff pattern:$0x75316420]
        %v296 = vld.sshfl [vmem:[#allocation1 + $0x8] sm:$0xff pattern:$0x75316420]
        %v299 = vsel %vm258, %v295, 0.0
        %v300 = vrot.slane %v299, 4
        %v301 = vadd.f32 %v299, %v300
        %v302 = vrot.slane %v301, 2
        %v303 = vadd.f32 %v301, %v302
        %v304 = vrot.slane %v303, 1
        %v305 = vadd.f32 %v303, %v304
        %v306 = vsel %vm258, %v296, 0.0
        %v307 = vrot.slane %v306, 4
        %v308 = vadd.f32 %v306, %v307
        %v309 = vrot.slane %v308, 2
        %v310 = vadd.f32 %v308, %v309
        %v311 = vrot.slane %v310, 1
        %v312 = vadd.f32 %v310, %v311
        %v313 = vld [vmem:[%s1] sm:$0xff]
        %v314 = vld [vmem:[%s1 + $0x8] sm:$0xff]
        %v315 = vld [vmem:[%s1 + $0x10] sm:$0xff]
        %v316 = vld [vmem:[%s1 + $0x18] sm:$0xff]
        %v317 = vld [vmem:[%s1 + $0x20] sm:$0xff]
        %v318 = vld [vmem:[%s1 + $0x28] sm:$0xff]
        %v319 = vld [vmem:[%s1 + $0x30] sm:$0xff]
        %v320 = vld [vmem:[%s1 + $0x38] sm:$0xff]
        %v321 = vld [vmem:[%s1 + $0x40] sm:$0xff]
        %v322 = vld [vmem:[%s1 + $0x48] sm:$0xff]
        %v323 = vld [vmem:[%s1 + $0x50] sm:$0xff]
        %v324 = vld [vmem:[%s1 + $0x58] sm:$0xff]
        %v325 = vld [vmem:[%s1 + $0x60] sm:$0xff]
        %v326 = vld [vmem:[%s1 + $0x68] sm:$0xff]
        %v327 = vld [vmem:[%s1 + $0x70] sm:$0xff]
        %v328 = vld [vmem:[%s1 + $0x78] sm:$0xff]
        %v329 = vld [vmem:[%s1 + $0x80] sm:$0xff]
        %v330 = vld [vmem:[%s1 + $0x88] sm:$0xff]
        %v331 = vld [vmem:[%s1 + $0x90] sm:$0xff]
        %v332 = vld [vmem:[%s1 + $0x98] sm:$0xff]
        %v333 = vld [vmem:[%s1 + $0xa0] sm:$0xff]
        %v334 = vld [vmem:[%s1 + $0xa8] sm:$0xff]
        %v335 = vld [vmem:[%s1 + $0xb0] sm:$0xff]
        %v336 = vld [vmem:[%s1 + $0xb8] sm:$0xff]
        %v337 = vld [vmem:[%s1 + $0xc0] sm:$0xff]
        %v338 = vld [vmem:[%s1 + $0xc8] sm:$0xff]
        %v339 = vld [vmem:[%s1 + $0xd0] sm:$0xff]
        %v340 = vld [vmem:[%s1 + $0xd8] sm:$0xff]
        %v341 = vld [vmem:[%s1 + $0xe0] sm:$0xff]
        %v342 = vld [vmem:[%s1 + $0xe8] sm:$0xff]
        %v343 = vld [vmem:[%s1 + $0xf0] sm:$0xff]
        %v344 = vld [vmem:[%s1 + $0xf8] sm:$0xff]
        %345 = vmatpush.msra.mxu0 %v328
        %346 = vmatpush.msra.mxu0 %v327
        %347 = vmatpush.msra.mxu0 %v326
        %348 = vmatpush.msra.mxu0 %v325
        %349 = vmatpush.msra.mxu0 %v324
        %350 = vmatpush.msra.mxu0 %v323
        %351 = vmatpush.msra.mxu0 %v322
        %352 = vmatpush.msra.mxu0 %v321
        %353 = vmatpush.msra.mxu0 %v320
        %354 = vmatpush.msra.mxu0 %v319
        %355 = vmatpush.msra.mxu0 %v318
        %356 = vmatpush.msra.mxu0 %v317
        %357 = vmatpush.msra.mxu0 %v316
        %358 = vmatpush.msra.mxu0 %v315
        %359 = vmatpush.msra.mxu0 %v314
        %360 = vmatpush.msra.mxu0 %v313
        %361 = vmatmul.f32.gmra.mxu0 %v286
        %v362 = vpop.f32.mrf.mxu0
        %v363 = vadd.f32 0.0, %v362
        %364 = vdwg.mxu0
        %365 = vmatpush.msra.mxu0 %v344
        %366 = vmatpush.msra.mxu0 %v343
        %367 = vmatpush.msra.mxu0 %v342
        %368 = vmatpush.msra.mxu0 %v341
        %369 = vmatpush.msra.mxu0 %v340
        %370 = vmatpush.msra.mxu0 %v339
        %371 = vmatpush.msra.mxu0 %v338
        %372 = vmatpush.msra.mxu0 %v337
        %373 = vmatpush.msra.mxu0 %v336
        %374 = vmatpush.msra.mxu0 %v335
        %375 = vmatpush.msra.mxu0 %v334
        %376 = vmatpush.msra.mxu0 %v333
        %377 = vmatpush.msra.mxu0 %v332
        %378 = vmatpush.msra.mxu0 %v331
        %379 = vmatpush.msra.mxu0 %v330
        %380 = vmatpush.msra.mxu0 %v329
        %381 = vmatmul.f32.gmra.mxu0 %v293
        %v382 = vpop.f32.mrf.mxu0
        %v383 = vadd.f32 %v363, %v382
        %384 = vdwg.mxu0
        %385 = vmatpush.msra.mxu0 %v328
        %386 = vmatpush.msra.mxu0 %v327
        %387 = vmatpush.msra.mxu0 %v326
        %388 = vmatpush.msra.mxu0 %v325
        %389 = vmatpush.msra.mxu0 %v324
        %390 = vmatpush.msra.mxu0 %v323
        %391 = vmatpush.msra.mxu0 %v322
        %392 = vmatpush.msra.mxu0 %v321
        %393 = vmatpush.msra.mxu0 %v320
        %394 = vmatpush.msra.mxu0 %v319
        %395 = vmatpush.msra.mxu0 %v318
        %396 = vmatpush.msra.mxu0 %v317
        %397 = vmatpush.msra.mxu0 %v316
        %398 = vmatpush.msra.mxu0 %v315
        %399 = vmatpush.msra.mxu0 %v314
        %400 = vmatpush.msra.mxu0 %v313
        %401 = vmatmul.f32.gmra.mxu0 %v305
        %v402 = vpop.f32.mrf.mxu0
        %v403 = vadd.f32 0.0, %v402
        %404 = vdwg.mxu0
        %405 = vmatpush.msra.mxu0 %v344
        %406 = vmatpush.msra.mxu0 %v343
        %407 = vmatpush.msra.mxu0 %v342
        %408 = vmatpush.msra.mxu0 %v341
        %409 = vmatpush.msra.mxu0 %v340
        %410 = vmatpush.msra.mxu0 %v339
        %411 = vmatpush.msra.mxu0 %v338
        %412 = vmatpush.msra.mxu0 %v337
        %413 = vmatpush.msra.mxu0 %v336
        %414 = vmatpush.msra.mxu0 %v335
        %415 = vmatpush.msra.mxu0 %v334
        %416 = vmatpush.msra.mxu0 %v333
        %417 = vmatpush.msra.mxu0 %v332
        %418 = vmatpush.msra.mxu0 %v331
        %419 = vmatpush.msra.mxu0 %v330
        %420 = vmatpush.msra.mxu0 %v329
        %421 = vmatmul.f32.gmra.mxu0 %v312
        %v422 = vpop.f32.mrf.mxu0
        %v423 = vadd.f32 %v403, %v422
        %424 = vdwg.mxu0
        %v425 = vmul.f32 %v263, 0.00390625
        %v426 = vmul.f32 %v263, %v425
        %v427 = vsub.f32 %v274, %v426
        %v428 = vmax.f32 %v427, 0.0
        %v429 = vmul.f32 %v428, 0.003921569
        %v430 = vrsqrt.pop %v429
        %v431 = vmul.f32 %v430, %v429
        %v432 = vmul.f32 %v431, %v430
        %v433 = vmul.f32 0.5, %v432
        %v434 = vsub.f32 1.5, %v433
        %v435 = vmul.f32 %v430, %v434
        %v436 = vmul.f32 %v429, %v435
        %vm437 = vcmp.eq.f32.partialorder %v429, inf
        %v438 = vsel %vm437, %v429, %v436
        %vm439 = vcmp.eq.f32.partialorder %v429, 0.0
        %v440 = vand.u32 %v429, 2147483648
        %v441 = vsel %vm439, %v440, %v438
        %s442 = sld [smem:[#allocation5]]
        %v443 = vstv %s442
        %v444 = vmul.f32 %v443, %v425
        %s445 = sld [smem:[#allocation5 + $0x1]]
        %v446 = vstv %s445
        %v447 = vmul.f32 %v446, %v441
        %v448 = vadd.f32 %v444, %v447
        %v450 = vlaneseq
        %v451 = vand.u32 %v450, 127
        %v452 = vadd.s32 %v451, 4294967295
        %v453 = vperm.slane %v448, %v452
        %vm455 = vcmask 7168
        %v456 = vsel %vm455, 0.0, %v453
        %vm457 = vcmask 39936
        %v458 = vsel %vm457, %v456, 0.0
        %s459 = sld [smem:[#allocation2]]
        %v460 = vstv %s459
        %v461 = vmul.f32 %v460, %v458
        %v462 = vadd.f32 %v461, 0.0
        %s463 = sld [smem:[#allocation2 + $0x1]]
        %v464 = vstv %s463
        %v465 = vmul.f32 %v464, %v458
        %467 = vrot.lane.b32.xlu0 %v465, 127
        %v468 = vpop.permute.xlu0 %467
        %v470 = vadd.f32 %v462, %v468
        %s471 = sld [smem:[#allocation2 + $0x2]]
        %v472 = vstv %s471
        %v473 = vmul.f32 %v472, %v458
        %475 = vrot.lane.b32.xlu0 %v473, 126
        %v476 = vpop.permute.xlu0 %475
        %v478 = vadd.f32 %v470, %v476
        %v479 = vsub.f32 0.0, %v478
        %v480 = vmul.f32 %v479, 1.442695
        %v481 = vpow.pop %v480
        %v482 = vadd.f32 %v481, 1.0
        %v483 = vrcp.pop %v482
        %v484 = vmul.f32 %v482, %v483
        %v485 = vsub.f32 1.0, %v484
        %v486 = vmul.f32 %v483, %v485
        %v487 = vadd.f32 %v483, %v486
        %vm488 = vweird.f32 %v482
        %vm489 = vweird.f32 %v483
        %vm490 = vmor %vm488, %vm489
        %v491 = vsel %vm490, %v483, %v487
        %v492 = vand.u32 2147483647, %v482
        %vm493 = vcmp.eq.f32.partialorder %v492, 8.507059e+37
        %v494 = vand.u32 %v482, 2147483648
        %v495 = vor.u32 1.1754944e-38, %v494
        %v496 = vsel %vm493, %v495, %v491
        %v497 = vmul.f32 0.33333334, %v496
        %v498 = vmul.f32 %v383, 0.015625
        %v499 = vmul.f32 %v383, %v498
        %v500 = vsub.f32 %v423, %v499
        %v501 = vmax.f32 %v500, 0.0
        %v502 = vmul.f32 %v501, 0.015873017
        %v503 = vrsqrt.pop %v502
        %v504 = vmul.f32 %v503, %v502
        %v505 = vmul.f32 %v504, %v503
        %v506 = vmul.f32 0.5, %v505
        %v507 = vsub.f32 1.5, %v506
        %v508 = vmul.f32 %v503, %v507
        %v509 = vmul.f32 %v502, %v508
        %vm510 = vcmp.eq.f32.partialorder %v502, inf
        %v511 = vsel %vm510, %v502, %v509
        %vm512 = vcmp.eq.f32.partialorder %v502, 0.0
        %v513 = vand.u32 %v502, 2147483648
        %v514 = vsel %vm512, %v513, %v511
        %s515 = sld [smem:[#allocation5 + $0x80]]
        %v516 = vstv %s515
        %v517 = vmul.f32 %v516, %v498
        %s518 = sld [smem:[#allocation5 + $0x81]]
        %v519 = vstv %s518
        %v520 = vmul.f32 %v519, %v514
        %v521 = vadd.f32 %v517, %v520
        %523 = vrot.lane.b32.xlu0 %v521, 1
        %v524 = vpop.permute.xlu0 %523
        %v526 = vsel %vm455, 0.0, %v524
        %vm527 = vcmask 138240
        %v528 = vsel %vm527, %v526, 0.0
        %s529 = sld [smem:[#allocation2 + $0x80]]
        %v530 = vstv %s529
        %v531 = vmul.f32 %v530, %v528
        %v532 = vadd.f32 %v531, 0.0
        %s533 = sld [smem:[#allocation2 + $0x81]]
        %v534 = vstv %s533
        %v535 = vmul.f32 %v534, %v528
        %537 = vrot.lane.b32.xlu0 %v535, 127
        %v538 = vpop.permute.xlu0 %537
        %v540 = vadd.f32 %v532, %v538
        %s541 = sld [smem:[#allocation2 + $0x82]]
        %v542 = vstv %s541
        %v543 = vmul.f32 %v542, %v528
        %545 = vrot.lane.b32.xlu0 %v543, 126
        %v546 = vpop.permute.xlu0 %545
        %v548 = vadd.f32 %v540, %v546
        %v549 = vsub.f32 0.0, %v548
        %v550 = vmul.f32 %v549, 1.442695
        %v551 = vpow.pop %v550
        %v552 = vadd.f32 %v551, 1.0
        %v553 = vrcp.pop %v552
        %v554 = vmul.f32 %v552, %v553
        %v555 = vsub.f32 1.0, %v554
        %v556 = vmul.f32 %v553, %v555
        %v557 = vadd.f32 %v553, %v556
        %vm558 = vweird.f32 %v552
        %vm559 = vweird.f32 %v553
        %vm560 = vmor %vm558, %vm559
        %v561 = vsel %vm560, %v553, %v557
        %v562 = vand.u32 2147483647, %v552
        %vm563 = vcmp.eq.f32.partialorder %v562, 8.507059e+37
        %v564 = vand.u32 %v552, 2147483648
        %v565 = vor.u32 1.1754944e-38, %v564
        %v566 = vsel %vm563, %v565, %v561
        %v567 = vmul.f32 0.33333334, %v566
        %s568 = sld [smem:[#allocation5 + $0x100]]
        %v569 = vstv %s568
        %v570 = vmul.f32 %v569, %v498
        %s571 = sld [smem:[#allocation5 + $0x101]]
        %v572 = vstv %s571
        %v573 = vmul.f32 %v572, %v514
        %v574 = vadd.f32 %v570, %v573
        %576 = vrot.lane.b32.xlu0 %v574, 113
        %v577 = vpop.permute.xlu0 %576
        %v579 = vsel %vm455, 0.0, %v577
        %v580 = vsel %vm527, %v579, 0.0
        %s581 = sld [smem:[#allocation2 + $0x100]]
        %v582 = vstv %s581
        %v583 = vmul.f32 %v582, %v580
        %v584 = vadd.f32 %v583, 0.0
        %s585 = sld [smem:[#allocation2 + $0x101]]
        %v586 = vstv %s585
        %v587 = vmul.f32 %v586, %v580
        %589 = vrot.lane.b32.xlu0 %v587, 127
        %v590 = vpop.permute.xlu0 %589
        %v592 = vadd.f32 %v584, %v590
        %s593 = sld [smem:[#allocation2 + $0x102]]
        %v594 = vstv %s593
        %v595 = vmul.f32 %v594, %v580
        %597 = vrot.lane.b32.xlu0 %v595, 126
        %v598 = vpop.permute.xlu0 %597
        %v600 = vadd.f32 %v592, %v598
        %v601 = vsub.f32 0.0, %v600
        %v602 = vmul.f32 %v601, 1.442695
        %v603 = vpow.pop %v602
        %v604 = vadd.f32 %v603, 1.0
        %v605 = vrcp.pop %v604
        %v606 = vmul.f32 %v604, %v605
        %v607 = vsub.f32 1.0, %v606
        %v608 = vmul.f32 %v605, %v607
        %v609 = vadd.f32 %v605, %v608
        %vm610 = vweird.f32 %v604
        %vm611 = vweird.f32 %v605
        %vm612 = vmor %vm610, %vm611
        %v613 = vsel %vm612, %v605, %v609
        %v614 = vand.u32 2147483647, %v604
        %vm615 = vcmp.eq.f32.partialorder %v614, 8.507059e+37
        %v616 = vand.u32 %v604, 2147483648
        %v617 = vor.u32 1.1754944e-38, %v616
        %v618 = vsel %vm615, %v617, %v613
        %v619 = vmul.f32 0.33333334, %v618
        %621 = vrot.lane.b32.xlu0 %v619, 16
        %v622 = vpop.permute.xlu0 %621
        %vm624 = vcmask 130048
        %v625 = vsel %vm624, %v567, %v622
        %v626 = vld [vmem:[%s2] sm:$0xff]
        %v627 = vld [vmem:[%s2 + $0x8] sm:$0xff]
        %v628 = vld [vmem:[%s2 + $0x10] sm:$0xff]
        %v629 = vld [vmem:[%s2 + $0x18] sm:$0xff]
        %v630 = vld [vmem:[%s2 + $0x20] sm:$0xff]
        %v631 = vld [vmem:[%s2 + $0x28] sm:$0xff]
        %v632 = vld [vmem:[%s2 + $0x30] sm:$0xff]
        %v633 = vld [vmem:[%s2 + $0x38] sm:$0xff]
        %vm634 = vcmask 261120
        %v636 = vsel %vm634, %v625, 0
        %638 = vmatpush.msra.mxu0 0.0
        %639 = vmatpush.msra.mxu0 0.0
        %640 = vmatpush.msra.mxu0 0.0
        %641 = vmatpush.msra.mxu0 0.0
        %642 = vmatpush.msra.mxu0 0.0
        %643 = vmatpush.msra.mxu0 0.0
        %644 = vmatpush.msra.mxu0 0.0
        %645 = vmatpush.msra.mxu0 0.0
        %646 = vmatpush.msra.mxu0 0.0
        %647 = vmatpush.msra.mxu0 0.0
        %648 = vmatpush.msra.mxu0 0.0
        %649 = vmatpush.msra.mxu0 0.0
        %650 = vmatpush.msra.mxu0 %v632
        %651 = vmatpush.msra.mxu0 %v630
        %652 = vmatpush.msra.mxu0 %v628
        %653 = vmatpush.msra.mxu0 %v626
        %654 = vmatmul.f32.gmra.mxu0 %v636
        %v655 = vpop.f32.mrf.mxu0
        %v656 = vadd.f32 0.0, %v655
        %657 = vdwg.mxu0
        %658 = vmatpush.msra.mxu0 0.0
        %659 = vmatpush.msra.mxu0 0.0
        %660 = vmatpush.msra.mxu0 0.0
        %661 = vmatpush.msra.mxu0 0.0
        %662 = vmatpush.msra.mxu0 0.0
        %663 = vmatpush.msra.mxu0 0.0
        %664 = vmatpush.msra.mxu0 0.0
        %665 = vmatpush.msra.mxu0 0.0
        %666 = vmatpush.msra.mxu0 0.0
        %667 = vmatpush.msra.mxu0 0.0
        %668 = vmatpush.msra.mxu0 0.0
        %669 = vmatpush.msra.mxu0 0.0
        %670 = vmatpush.msra.mxu0 %v633
        %671 = vmatpush.msra.mxu0 %v631
        %672 = vmatpush.msra.mxu0 %v629
        %673 = vmatpush.msra.mxu0 %v627
        %674 = vmatmul.f32.gmra.mxu0 %v636
        %v675 = vpop.f32.mrf.mxu0
        %v676 = vadd.f32 0.0, %v675
        %677 = vdwg.mxu0
        %v678 = vperm.slane %v497, 0
        %v679 = vlaneseq
        %v680 = vshrl.u32 %v679, 7
        %682 = vset.pattern.permute.xlu0 %v680
        %683 = vperm.xlu0 %682, %v678
        %v684 = vpop.permute.xlu0 %683
        %v685 = vperm.slane %v656, 0
        %v686 = vperm.slane %v676, 0
        %v687 = vadd.f32 %v684, %v685
        %v688 = vadd.f32 %v684, %v686
        %v691 = vrot.slane %v688, 4
        %v692 = vsel %vm258, %v687, %v691
        %v694 = vmul.f32 %v250, %v692
        %695 = vst [vmem:[%s244] sm:$0xff] %v694
        %s696 = sand.u32 %s139, 1
        %s697 = scalar_lea.sflag [#allocation3], %s696
        %s698 = sand.u32 %s139, 1
        %s699 = smul.addr %s698, 8
        %s700 = scalar_lea.vmem [#allocation7], %s699
        // Predicated region
        $region49: #{tpu_custom_call.1} parent=39 // pred_check
          %p701 = pneg %p149
        $region50: #{tpu_custom_call.1} parent=39 // pred_check_branch
          %703 = sbr.rel (%p701) target = $region52
        $region51: #{tpu_custom_call.1} parent=39 // pred_region
          %705 = vsyncadd %s697, 0
          %s706 = smul.addr %s21, 2
          %s707 = smul.addr %s706, 4
          %s708 = scalar_lea.hbm %s5, %s707
          %s710 = sshll.u32 %s700, 4
          %s711 = int_to_ptr.vmem [resolvable:$true] %s710
          %s712 = sshll.u32 %s708, 4
          %s713 = int_to_ptr.hbm [resolvable:$true] %s712
          %715 = dma.vmem_to_hbm [thread:$0]  %s711, 128, %s713, %s697
        $region52: #{tpu_custom_call.1} parent=39 // pred_fallthru
          _
      $region40: #{tpu_custom_call.1} parent=5 // pred_fallthru
        _
      %p716 = scmp.le.s32.totalorder 2, %s16
      // Predicated region
      $region53: #{tpu_custom_call.1} parent=5 // pred_check
        %p717 = pneg %p716
      $region54: #{tpu_custom_call.1} parent=5 // pred_check_branch
        %719 = sbr.rel (%p717) target = $region56
      $region55: #{tpu_custom_call.1} parent=5 // pred_region
        %s720 = ssub.s32 %s16, 2
        // Predicated region
        $region57: #{tpu_custom_call.1} parent=55 // pred_check
          %p721 = pneg %p155
        $region58: #{tpu_custom_call.1} parent=55 // pred_check_branch
          %723 = sbr.rel (%p721) target = $region60
        $region59: #{tpu_custom_call.1} parent=55 // pred_region
          %s724 = sand.u32 %s140, 1
          %s725 = scalar_lea.sflag [#allocation3], %s724
          %s726 = sand.u32 %s140, 1
          %s727 = smul.addr %s726, 8
          %s728 = scalar_lea.vmem [#allocation7], %s727
          %730 = dma.done %s725, 128
        $region60: #{tpu_custom_call.1} parent=55 // pred_fallthru
          _
      $region56: #{tpu_custom_call.1} parent=5 // pred_fallthru
        _
    $region6: #{tpu_custom_call.1} parent=1 // loop_footer
      %s20 = sadd.s32 1, %s16
    $region7: #{tpu_custom_call.1} parent=1 // loop_footer_branch
      %15 = sbr.rel target = $region3
    $region8: #{tpu_custom_call.1} parent=1 // loop_exit
      _
    %731 = vsyncpa [#allocation3], 1
    %s732 = scalar_lea.sflag [#allocation3], 1
    %733 = vsyncpa %s732, 1
    %734 = vsyncpa [#allocation4], 1
    %s735 = scalar_lea.sflag [#allocation4], 1
    %736 = vsyncpa %s735, 1
    %737 = vsyncpa [#allocation6], 1

</llo_original>
